<compile_context>
chip_gen: v6e
topology: v6e:2x2x1
jax: 0.10.0
libtpu: 0.0.40
codegen_flags: <defaults>
</compile_context>

<pallas_src>
import jax
import jax.numpy as jnp
from jax.experimental import pallas as pl
from jax.experimental.pallas import tpu as pltpu


def _round_up(x, m):
    return ((x + m - 1) // m) * m


def _cdiv(a, b):
    return (a + b - 1) // b


def _pad_bytes(r, c):
    """f32 bytes of an (8,128)-padded [r, c] VMEM tile."""
    return _round_up(max(r, 1), 8) * _round_up(max(c, 1), 128) * 4


def _vmem_budget_bytes():
    """Physical VMEM capacity minus ~8 MiB headroom (generation-aware: 64 MiB on v7x, 128 MiB v5e/v6e)."""
    cap = 64 << 20
    try:
        info = pltpu.get_tpu_info()
        cap = int(getattr(info, "vmem_capacity_bytes", cap))
    except Exception:
        pass
    return max(cap - (8 << 20), 16 << 20)


# --------------------------------------------------------------------------------------------------
# Kernel
# --------------------------------------------------------------------------------------------------
def _embedder_vae_kernel(x_ref, wx_ref, aux_ref, mean_ref, log_std_ref):
    """acc = x @ Wx + cos(theta)*w_cos + sin(theta)*w_sin + b ; mean/log_std = ReLU(acc) split on lanes.

    x_ref   : [bm, inp_dim]  raw input tile (cols: pos(2), theta(1), features(F))
    wx_ref  : [inp_dim, 2E]  fused weight (mean | log_std), raw-theta row zeroed
    aux_ref : [8, 2E]        row 0 = w_cos, row 1 = w_sin, row 2 = bias, rest zero padding
    """
    x = x_ref[...].astype(jnp.float32)                                   # [bm, inp_dim]
    theta = x[:, 2:3]                                                    # [bm, 1]

    # pos + feature contribution of BOTH heads in one MXU matmul (theta row of Wx is zero)
    acc = jnp.dot(x, wx_ref[...], preferred_element_type=jnp.float32)    # [bm, 2E]

    aux = aux_ref[...].astype(jnp.float32)                               # [8, 2E]
    # fused expand_theta: cos/sin on EUP, rank-1 broadcast multiply-adds on VPU
    acc = acc + jnp.cos(theta) * aux[0:1] + jnp.sin(theta) * aux[1:2] + aux[2:3]
    acc = jnp.maximum(acc, 0.0)                                          # ReLU (both heads)

    E = mean_ref.shape[-1]
    mean_ref[...] = acc[:, :E].astype(mean_ref.dtype)
    log_std_ref[...] = acc[:, E:].astype(log_std_ref.dtype)


# --------------------------------------------------------------------------------------------------
# One-time parameter plumbing (hoisted out of the per-call path)
# --------------------------------------------------------------------------------------------------
def prepare_params(params, inp_dim):
    """Fuse both heads and reorder rows so raw x streams straight into the kernel."""
    d_in, E = params["w_mean"].shape
    assert d_in == inp_dim + 1, "expand_theta=True expects weights of shape [inp_dim+1, emb_dim]"
    F = inp_dim - 3
    N = 2 * E

    w_full = jnp.concatenate([params["w_mean"], params["w_std"]], axis=1)            # [d_in, 2E]
    b_full = jnp.concatenate([params["b_mean"], params["b_std"]], axis=0).reshape(1, N)

    # module input = [pos(2), feat(F), cos(theta), sin(theta)]; raw x = [pos(2), theta(1), feat(F)]
    # -> Wx rows reordered so x @ Wx covers pos+feat, raw-theta column contributes nothing.
    w_x = jnp.concatenate(
        [w_full[0:2],                                   # pos rows -> x cols 0:2
         jnp.zeros((1, N), w_full.dtype),               # raw theta (x col 2) dropped
         w_full[2:2 + F]],                               # feature rows -> x cols 3:
        axis=0)                                          # [inp_dim, 2E]

    aux = jnp.concatenate(
        [w_full[d_in - 2:d_in - 1],                      # w_cos
         w_full[d_in - 1:d_in],                          # w_sin
         b_full,                                         # bias
         jnp.zeros((5, N), w_full.dtype)],               # sublane padding -> [8, 2E]
        axis=0)

    return {"w_x": w_x, "aux": aux, "inp_dim": inp_dim, "emb_dim": E}


def _derive_bm_tile(B, inp_dim, E, budget_bytes):
    """Largest batch tile (multiple of 8, <=8192) fitting the VMEM budget, with >=2 parallel steps."""
    N = 2 * E
    # per-row cost of the double-buffered streaming tiles (x + two outputs), lane-padded
    row_bytes = 2 * (_round_up(inp_dim, 128) + 2 * _round_up(E, 128)) * 4
    # resident weights/aux (default 2-deep buffering) + compiler scratch headroom
    fixed = 2 * (_pad_bytes(inp_dim, N) + _pad_bytes(8, N)) + (4 << 20)
    avail = max(budget_bytes - fixed, 8 * row_bytes)
    cap = max(8, (avail // row_bytes) // 8 * 8)
    cap = min(cap, 8192)
    # aim for >= 2 grid steps so the "parallel" batch axis shards across both v7x TensorCores
    target = max(8, _round_up(_cdiv(B, 2), 8))
    return int(min(cap, target))


# --------------------------------------------------------------------------------------------------
# Forward
# --------------------------------------------------------------------------------------------------
def embedder_vae_forward(x, prepared, *, bm_tile=None):
    """x: [..., inp_dim] float32. Returns (mean, log_std): each [..., emb_dim]."""
    *lead, inp_dim = x.shape
    assert inp_dim == prepared["inp_dim"]
    E = prepared["emb_dim"]
    N = 2 * E
    w_x, aux = prepared["w_x"], prepared["aux"]

    x2 = x.reshape(-1, inp_dim).astype(jnp.float32)
    B = x2.shape[0]

    budget = _vmem_budget_bytes()
    if bm_tile is None:
        bm_tile = _derive_bm_tile(B, inp_dim, E, budget)
    bm_tile = max(8, _round_up(bm_tile, 8))

    grid = (_cdiv(B, bm_tile),)   # no padding: partial final block's writeback is masked by Pallas

    # actual tile footprint (2-deep buffering everywhere), no extra 2x hedge
    vmem_bytes = (2 * _pad_bytes(bm_tile, inp_dim)      # x tile
                  + 2 * 2 * _pad_bytes(bm_tile, E)      # mean + log_std tiles
                  + 2 * _pad_bytes(inp_dim, N)          # fused Wx
                  + 2 * _pad_bytes(8, N))               # aux slab
    vmem_limit = int(min(max(vmem_bytes + (4 << 20), 16 << 20), budget))

    mean, log_std = pl.pallas_call(
        _embedder_vae_kernel,
        out_shape=(jax.ShapeDtypeStruct((B, E), jnp.float32),
                   jax.ShapeDtypeStruct((B, E), jnp.float32)),
        grid_spec=pltpu.PrefetchScalarGridSpec(
            num_scalar_prefetch=0,
            grid=grid,
            in_specs=[
                pl.BlockSpec((bm_tile, inp_dim), lambda i: (i, 0)),   # raw x tile
                pl.BlockSpec((inp_dim, N), lambda i: (0, 0)),         # fused Wx (resident)
                pl.BlockSpec((8, N), lambda i: (0, 0)),               # aux: w_cos / w_sin / bias
            ],
            out_specs=[
                pl.BlockSpec((bm_tile, E), lambda i: (i, 0)),         # mean
                pl.BlockSpec((bm_tile, E), lambda i: (i, 0)),         # log_std
            ],
        ),
        compiler_params=pltpu.CompilerParams(
            dimension_semantics=("parallel",),
            vmem_limit_bytes=vmem_limit),
    )(x2, w_x, aux)

    return mean.reshape(*lead, E), log_std.reshape(*lead, E)


# --------------------------------------------------------------------------------------------------
# Init / reference / demo
# --------------------------------------------------------------------------------------------------
def init_params(key, inp_dim, emb_dim):
    """Deterministic init matching nn.Linear(inp_dim+1, emb_dim) (PyTorch default uniform)."""
    d_in = inp_dim + 1  # expand_theta=True
    k = 1.0 / jnp.sqrt(jnp.float32(d_in))
    k1, k2, k3, k4 = jax.random.split(key, 4)
    # stored as [in, out] (pre-transposed PyTorch weight)
    w_mean = jax.random.uniform(k1, (d_in, emb_dim), jnp.float32, -k, k)
    b_mean = jax.random.uniform(k2, (emb_dim,), jnp.float32, -k, k)
    w_std = jax.random.uniform(k3, (d_in, emb_dim), jnp.float32, -k, k)
    b_std = jax.random.uniform(k4, (emb_dim,), jnp.float32, -k, k)
    return dict(w_mean=w_mean, b_mean=b_mean, w_std=w_std, b_std=b_std)


def _reference(x, params):
    pos = x[..., :2]
    theta = x[..., 2:3]
    feat = x[..., 3:]
    inp = jnp.concatenate([pos, feat, jnp.cos(theta), jnp.sin(theta)], axis=-1)
    hp = jax.lax.Precision.HIGHEST
    mean = jax.nn.relu(jnp.dot(inp, params["w_mean"], precision=hp) + params["b_mean"])
    std = jax.nn.relu(jnp.dot(inp, params["w_std"], precision=hp) + params["b_std"])
    return mean, std


if __name__ == "__main__":
    key = jax.random.PRNGKey(0)
    k_x, k_p = jax.random.split(key)

    # Small shapes consistent with the module; B=20 with the derived bm_tile=16 exercises a
    # 2-step "parallel" grid AND the unpadded partial final block (rows 16..19).
    B, inp_dim, emb_dim = 20, 8, 32
    x = jax.random.normal(k_x, (B, inp_dim), jnp.float32)
    params = init_params(k_p, inp_dim, emb_dim)

    prepared = prepare_params(params, inp_dim)            # one-time weight plumbing, reused per call
    mean, log_std = embedder_vae_forward(x, prepared)
    jax.block_until_ready((mean, log_std))

    ref_mean, ref_std = _reference(x, params)
    assert mean.shape == (B, emb_dim) and log_std.shape == (B, emb_dim)
    assert jnp.allclose(mean, ref_mean, atol=2e-5, rtol=2e-5)
    assert jnp.allclose(log_std, ref_std, atol=2e-5, rtol=2e-5)
    print("KERNEL_OK")
</pallas_src>

<mosaic_0001>
module attributes {stable_mosaic.version = 11 : i64} {
  func.func @_embedder_vae_kernel(%arg0: i32, %arg1: memref<16x8xf32, #tpu.memory_space<vmem>>, %arg2: memref<8x64xf32, #tpu.memory_space<vmem>>, %arg3: memref<8x64xf32, #tpu.memory_space<vmem>>, %arg4: memref<16x32xf32, #tpu.memory_space<vmem>>, %arg5: memref<16x32xf32, #tpu.memory_space<vmem>>) attributes {dimension_semantics = [#tpu.dimension_semantics<parallel>], iteration_bounds = array<i64: 2>, scalar_prefetch = 0 : i64, scratch_operands = 0 : i64, tpu.core_type = #tpu.core_type<tc>, window_params = [{transform_indices = @transform_0, window_bounds = array<i64: 16, 8>}, {pipeline_mode = #tpu.pipeline_mode<synchronous>, transform_indices = @transform_1, window_bounds = array<i64: 8, 64>}, {pipeline_mode = #tpu.pipeline_mode<synchronous>, transform_indices = @transform_2, window_bounds = array<i64: 8, 64>}, {transform_indices = @transform_3, window_bounds = array<i64: 16, 32>}, {transform_indices = @transform_4, window_bounds = array<i64: 16, 32>}]} {
    %c0 = arith.constant 0 : index
    %c0_0 = arith.constant 0 : index
    %0 = vector.load %arg1[%c0, %c0_0] : memref<16x8xf32, #tpu.memory_space<vmem>>, vector<16x8xf32>
    %1 = vector.extract_strided_slice %0 {offsets = [0, 2], sizes = [16, 1], strides = [1, 1]} : vector<16x8xf32> to vector<16x1xf32>
    %c0_1 = arith.constant 0 : index
    %c0_2 = arith.constant 0 : index
    %2 = vector.load %arg2[%c0_1, %c0_2] : memref<8x64xf32, #tpu.memory_space<vmem>>, vector<8x64xf32>
    %cst = arith.constant dense<0.000000e+00> : vector<16x64xf32>
    %3 = tpu.matmul %0, %2, %cst {dimension_numbers = #tpu.dot_dimension_numbers<[1], [0], [0], [1], [0, 0, 1, 1], [], []>} : vector<16x8xf32>, vector<8x64xf32>, vector<16x64xf32> -> vector<16x64xf32>
    %c0_3 = arith.constant 0 : index
    %c0_4 = arith.constant 0 : index
    %4 = vector.load %arg3[%c0_3, %c0_4] : memref<8x64xf32, #tpu.memory_space<vmem>>, vector<8x64xf32>
    %5 = math.cos %1 : vector<16x1xf32>
    %6 = vector.extract_strided_slice %4 {offsets = [0, 0], sizes = [1, 64], strides = [1, 1]} : vector<8x64xf32> to vector<1x64xf32>
    %7 = vector.broadcast %5 : vector<16x1xf32> to vector<16x64xf32>
    %8 = vector.broadcast %6 : vector<1x64xf32> to vector<16x64xf32>
    %9 = arith.mulf %7, %8 : vector<16x64xf32>
    %10 = arith.addf %3, %9 : vector<16x64xf32>
    %11 = math.sin %1 : vector<16x1xf32>
    %12 = vector.extract_strided_slice %4 {offsets = [1, 0], sizes = [1, 64], strides = [1, 1]} : vector<8x64xf32> to vector<1x64xf32>
    %13 = vector.broadcast %11 : vector<16x1xf32> to vector<16x64xf32>
    %14 = vector.broadcast %12 : vector<1x64xf32> to vector<16x64xf32>
    %15 = arith.mulf %13, %14 : vector<16x64xf32>
    %16 = arith.addf %10, %15 : vector<16x64xf32>
    %17 = vector.extract_strided_slice %4 {offsets = [2, 0], sizes = [1, 64], strides = [1, 1]} : vector<8x64xf32> to vector<1x64xf32>
    %18 = vector.broadcast %17 : vector<1x64xf32> to vector<16x64xf32>
    %19 = arith.addf %16, %18 : vector<16x64xf32>
    %cst_5 = arith.constant 0.000000e+00 : f32
    %20 = vector.broadcast %cst_5 : f32 to vector<16x64xf32>
    %21 = arith.maximumf %19, %20 : vector<16x64xf32>
    %22 = vector.extract_strided_slice %21 {offsets = [0, 0], sizes = [16, 32], strides = [1, 1]} : vector<16x64xf32> to vector<16x32xf32>
    %c0_6 = arith.constant 0 : index
    %c0_7 = arith.constant 0 : index
    %23 = vector.load %arg4[%c0_6, %c0_7] : memref<16x32xf32, #tpu.memory_space<vmem>>, vector<16x32xf32>
    tpu.vector_store %arg4[%c0_6, %c0_7], %22 {strides = array<i32>} : memref<16x32xf32, #tpu.memory_space<vmem>>, vector<16x32xf32>,
    %24 = vector.extract_strided_slice %21 {offsets = [0, 32], sizes = [16, 32], strides = [1, 1]} : vector<16x64xf32> to vector<16x32xf32>
    %c0_8 = arith.constant 0 : index
    %c0_9 = arith.constant 0 : index
    %25 = vector.load %arg5[%c0_8, %c0_9] : memref<16x32xf32, #tpu.memory_space<vmem>>, vector<16x32xf32>
    tpu.vector_store %arg5[%c0_8, %c0_9], %24 {strides = array<i32>} : memref<16x32xf32, #tpu.memory_space<vmem>>, vector<16x32xf32>,
    return
  }
  func.func @transform_0(%arg0: i32) -> (i32, i32) {
    %c0_i32 = arith.constant 0 : i32
    %c0_i32_0 = arith.constant 0 : i32
    return %arg0, %c0_i32 : i32, i32
  }
  func.func @transform_1(%arg0: i32) -> (i32, i32) {
    %c0_i32 = arith.constant 0 : i32
    %c0_i32_0 = arith.constant 0 : i32
    %c0_i32_1 = arith.constant 0 : i32
    return %c0_i32, %c0_i32_0 : i32, i32
  }
  func.func @transform_2(%arg0: i32) -> (i32, i32) {
    %c0_i32 = arith.constant 0 : i32
    %c0_i32_0 = arith.constant 0 : i32
    %c0_i32_1 = arith.constant 0 : i32
    return %c0_i32, %c0_i32_0 : i32, i32
  }
  func.func @transform_3(%arg0: i32) -> (i32, i32) {
    %c0_i32 = arith.constant 0 : i32
    %c0_i32_0 = arith.constant 0 : i32
    return %arg0, %c0_i32 : i32, i32
  }
  func.func @transform_4(%arg0: i32) -> (i32, i32) {
    %c0_i32 = arith.constant 0 : i32
    %c0_i32_0 = arith.constant 0 : i32
    return %arg0, %c0_i32 : i32, i32
  }
}

</mosaic_0001>

<llo_original>
// kernel: tpu_custom_call.1
$region0: #{tpu_custom_call.1}
  #allocation0 [shape = 'u32[]', space=smem, size = 0x4, offset = 0x4, fixed_abs, tag = 'smem constant byte address 0x4 - core index']
  #allocation1 [shape = 'u32[144,128]{1,0:T(1,128)}', space=vmem, size = 0x12000, scoped, tag = 'internal scratch']
  %s0 = inlined_call_operand.vmem [shape: f32[20,8], index: 0, kind: input, shape index: {}]
  %s1 = inlined_call_operand.vmem [shape: f32[8,64], index: 1, kind: input, shape index: {}]
  %s2 = inlined_call_operand.vmem [shape: f32[8,64], index: 2, kind: input, shape index: {}]
  %s3 = inlined_call_operand.hbm [shape: f32[20,32], index: 3, kind: output, shape index: {0}]
  %s4 = inlined_call_operand.hbm [shape: f32[20,32], index: 4, kind: output, shape index: {1}]
  %5 = xla_tuple %s3, %s4
  %s6 = sld [smem:[#allocation0]]
  $region53: #{tpu_custom_call.1} parent=0
    _
  %s8 = ssub.s32 1, %s6
  %s9 = scalar_select 0, %s8, %s6
  $region1: #{tpu_custom_call.1} parent=0
    #allocation2 [shape = 'u8[16384]{0}', space=vmem, size = 0x4000, scoped, tag = 'output window, operand 0']
    #allocation3 [shape = 's32[2]{0}', space=sflag, size = 0x8, scoped, tag = 'scoped memory for tpu_custom_call.1']
    #allocation4 [shape = 'u8[16384]{0}', space=vmem, size = 0x4000, scoped, tag = 'output window, operand 1']
    #allocation5 [shape = 's32[2]{0}', space=sflag, size = 0x8, scoped, tag = 'scoped memory for tpu_custom_call.1']
    %10 = vsyncpa [#allocation3], 0
    %s11 = scalar_lea.sflag [#allocation3], 1
    %12 = vsyncpa %s11, 0
    %13 = vsyncpa [#allocation5], 0
    %s14 = scalar_lea.sflag [#allocation5], 1
    %15 = vsyncpa %s14, 0
    loop: start=0, step=1, limit=4
    $region2: #{tpu_custom_call.1} parent=1 // loop_pre_header
      _
    $region3: #{tpu_custom_call.1} parent=1 // loop_header
      %s17 = sphi 0, %s21
      %p18 = scmp.ge.s32.totalorder %s17, 4
      %s27 = sphi 0, %s29
      %s30 = sphi 0, %s27
      %s31 = sphi 0, %s30
      %s47 = sphi 0, %s31
      %s51 = sphi 0, %s51
      %s53 = sphi 0, %s51
      %s54 = sphi 0, %s53
      %s68 = sphi 0, %s54
      %s72 = sphi 0, %s72
      %s74 = sphi 0, %s72
      %s75 = sphi 0, %s74
      %s89 = sphi 0, %s75
      %s95 = sphi 0, %s97
      %s98 = sphi 0, %s95
      %s99 = sphi 0, %s98
      %s115 = sphi 0, %s99
      %s121 = sphi 0, %s123
      %s124 = sphi 0, %s121
      %s125 = sphi 0, %s124
      %s141 = sphi 0, %s125
    $region4: #{tpu_custom_call.1} parent=1 // loop_header_branch
      %20 = sbr.rel (%p18) target = $region8
    $region5: #{tpu_custom_call.1} parent=1 // loop_body
      %s22 = ssub.s32 %s17, 1
      %s23 = ssub.s32 %s17, 2
      %s24 = sadd.s32 %s17, 1
      %s25 = ssub.s32 %s17, %s24
      %p26 = scmp.eq.s32.totalorder %s25, 0
      %s28 = sadd.s32 %s27, 1
      %s29 = scalar_select %p26, %s27, %s28
      %p32 = pneg %p26
      %p33 = scmp.eq.s32.totalorder %s17, 1
      %p34 = por %p32, %p33
      %p35 = scmp.ne.s32.totalorder %s27, %s30
      %p36 = scmp.eq.s32.totalorder %s17, 0
      %p37 = por %p35, %p36
      %p38 = scmp.ne.s32.totalorder %s27, %s30
      %p39 = scmp.eq.s32.totalorder %s22, 1
      %p40 = por %p38, %p39
      %p41 = scmp.ne.s32.totalorder %s30, %s31
      %p42 = scmp.eq.s32.totalorder %s22, 0
      %p43 = por %p41, %p42
      %p44 = scmp.ne.s32.totalorder %s30, %s31
      %p45 = scmp.eq.s32.totalorder %s23, 1
      %p46 = por %p44, %p45
      %p48 = scmp.ne.s32.totalorder %s31, %s47
      %p49 = scmp.eq.s32.totalorder %s23, 0
      %p50 = por %p48, %p49
      %s52 = sadd.s32 %s51, 1
      %p55 = scmp.eq.s32.totalorder %s17, 1
      %p56 = scmp.ne.s32.totalorder %s51, %s53
      %p57 = scmp.eq.s32.totalorder %s17, 0
      %p58 = por %p56, %p57
      %p59 = scmp.ne.s32.totalorder %s51, %s53
      %p60 = scmp.eq.s32.totalorder %s22, 1
      %p61 = por %p59, %p60
      %p62 = scmp.ne.s32.totalorder %s53, %s54
      %p63 = scmp.eq.s32.totalorder %s22, 0
      %p64 = por %p62, %p63
      %p65 = scmp.ne.s32.totalorder %s53, %s54
      %p66 = scmp.eq.s32.totalorder %s23, 1
      %p67 = por %p65, %p66
      %p69 = scmp.ne.s32.totalorder %s54, %s68
      %p70 = scmp.eq.s32.totalorder %s23, 0
      %p71 = por %p69, %p70
      %s73 = sadd.s32 %s72, 1
      %p76 = scmp.eq.s32.totalorder %s17, 1
      %p77 = scmp.ne.s32.totalorder %s72, %s74
      %p78 = scmp.eq.s32.totalorder %s17, 0
      %p79 = por %p77, %p78
      %p80 = scmp.ne.s32.totalorder %s72, %s74
      %p81 = scmp.eq.s32.totalorder %s22, 1
      %p82 = por %p80, %p81
      %p83 = scmp.ne.s32.totalorder %s74, %s75
      %p84 = scmp.eq.s32.totalorder %s22, 0
      %p85 = por %p83, %p84
      %p86 = scmp.ne.s32.totalorder %s74, %s75
      %p87 = scmp.eq.s32.totalorder %s23, 1
      %p88 = por %p86, %p87
      %p90 = scmp.ne.s32.totalorder %s75, %s89
      %p91 = scmp.eq.s32.totalorder %s23, 0
      %p92 = por %p90, %p91
      %s93 = ssub.s32 %s17, %s24
      %p94 = scmp.eq.s32.totalorder %s93, 0
      %s96 = sadd.s32 %s95, 1
      %s97 = scalar_select %p94, %s95, %s96
      %p100 = pneg %p94
      %p101 = scmp.eq.s32.totalorder %s17, 1
      %p102 = por %p100, %p101
      %p103 = scmp.ne.s32.totalorder %s95, %s98
      %p104 = scmp.eq.s32.totalorder %s17, 0
      %p105 = por %p103, %p104
      %p106 = scmp.ne.s32.totalorder %s95, %s98
      %p107 = scmp.eq.s32.totalorder %s22, 1
      %p108 = por %p106, %p107
      %p109 = scmp.ne.s32.totalorder %s98, %s99
      %p110 = scmp.eq.s32.totalorder %s22, 0
      %p111 = por %p109, %p110
      %p112 = scmp.ne.s32.totalorder %s98, %s99
      %p113 = scmp.eq.s32.totalorder %s23, 1
      %p114 = por %p112, %p113
      %p116 = scmp.ne.s32.totalorder %s99, %s115
      %p117 = scmp.eq.s32.totalorder %s23, 0
      %p118 = por %p116, %p117
      %s119 = ssub.s32 %s17, %s24
      %p120 = scmp.eq.s32.totalorder %s119, 0
      %s122 = sadd.s32 %s121, 1
      %s123 = scalar_select %p120, %s121, %s122
      %p126 = pneg %p120
      %p127 = scmp.eq.s32.totalorder %s17, 1
      %p128 = por %p126, %p127
      %p129 = scmp.ne.s32.totalorder %s121, %s124
      %p130 = scmp.eq.s32.totalorder %s17, 0
      %p131 = por %p129, %p130
      %p132 = scmp.ne.s32.totalorder %s121, %s124
      %p133 = scmp.eq.s32.totalorder %s22, 1
      %p134 = por %p132, %p133
      %p135 = scmp.ne.s32.totalorder %s124, %s125
      %p136 = scmp.eq.s32.totalorder %s22, 0
      %p137 = por %p135, %p136
      %p138 = scmp.ne.s32.totalorder %s124, %s125
      %p139 = scmp.eq.s32.totalorder %s23, 1
      %p140 = por %p138, %p139
      %p142 = scmp.ne.s32.totalorder %s125, %s141
      %p143 = scmp.eq.s32.totalorder %s23, 0
      %p144 = por %p142, %p143
      %p145 = scmp.le.s32.totalorder 1, %s17
      %p146 = scmp.lt.s32.totalorder %s17, 3
      %p147 = pnand %p145, %p146
      %p148 = pneg %p147
      // Predicated region
      $region9: #{tpu_custom_call.1} parent=5 // pred_check
        _
      $region10: #{tpu_custom_call.1} parent=5 // pred_check_branch
        %150 = sbr.rel (%p147) target = $region12
      $region11: #{tpu_custom_call.1} parent=5 // pred_region
        %s151 = ssub.s32 %s17, 1
        // Predicated region
        $region13: #{tpu_custom_call.1} parent=11 // pred_check
          %p152 = pneg %p64
        $region14: #{tpu_custom_call.1} parent=11 // pred_check_branch
          %154 = sbr.rel (%p152) target = $region16
        $region15: #{tpu_custom_call.1} parent=11 // pred_region
          _
        $region16: #{tpu_custom_call.1} parent=11 // pred_fallthru
          _
        // Predicated region
        $region17: #{tpu_custom_call.1} parent=11 // pred_check
          %p155 = pneg %p85
        $region18: #{tpu_custom_call.1} parent=11 // pred_check_branch
          %157 = sbr.rel (%p155) target = $region20
        $region19: #{tpu_custom_call.1} parent=11 // pred_region
          _
        $region20: #{tpu_custom_call.1} parent=11 // pred_fallthru
          _
      $region12: #{tpu_custom_call.1} parent=5 // pred_fallthru
        _
      %p158 = scmp.lt.s32.totalorder %s17, 2
      // Predicated region
      $region21: #{tpu_custom_call.1} parent=5 // pred_check
        %p159 = pneg %p158
      $region22: #{tpu_custom_call.1} parent=5 // pred_check_branch
        %161 = sbr.rel (%p159) target = $region24
      $region23: #{tpu_custom_call.1} parent=5 // pred_region
        // Predicated region
        $region25: #{tpu_custom_call.1} parent=23 // pred_check
          %p162 = pneg %p37
        $region26: #{tpu_custom_call.1} parent=23 // pred_check_branch
          %164 = sbr.rel (%p162) target = $region28
        $region27: #{tpu_custom_call.1} parent=23 // pred_region
          %s165 = smul.u32 2, %s17
          %s166 = ssub.s32 3, %s165
          %p167 = scmp.lt.s32.totalorder %s166, 2
          %s168 = scalar_select %p167, %s166, 2
          %s169 = smul.u32 128, %s168
          %p170 = scmp.lt.s32.totalorder %s165, 2
          %s171 = scalar_select %p170, %s165, 2
          %s172 = smul.addr %s171, 8
          %s173 = scalar_lea.vmem %s0, %s172
          %s174 = smul.u32 2, %s17
          %s175 = ssub.s32 3, %s174
          %p176 = scmp.lt.s32.totalorder %s175, 2
          %s177 = scalar_select %p176, %s175, 2
          %s178 = smul.u32 128, %s177
        $region28: #{tpu_custom_call.1} parent=23 // pred_fallthru
          _
      $region24: #{tpu_custom_call.1} parent=5 // pred_fallthru
        _
      %p179 = scmp.le.s32.totalorder 1, %s17
      %p180 = scmp.lt.s32.totalorder %s17, 3
      %p181 = pnand %p179, %p180
      %p182 = pneg %p181
      // Predicated region
      $region29: #{tpu_custom_call.1} parent=5 // pred_check
        _
      $region30: #{tpu_custom_call.1} parent=5 // pred_check_branch
        %184 = sbr.rel (%p181) target = $region32
      $region31: #{tpu_custom_call.1} parent=5 // pred_region
        %s185 = ssub.s32 %s17, 1
        %s186 = smul.u32 2, %s22
        %s187 = ssub.s32 3, %s186
        %p188 = scmp.lt.s32.totalorder %s187, 2
        %s189 = scalar_select %p188, %s187, 2
        %s190 = smul.u32 128, %s189
        %p191 = scmp.lt.s32.totalorder %s186, 2
        %s192 = scalar_select %p191, %s186, 2
        %s193 = smul.addr %s192, 8
        %s194 = scalar_lea.vmem %s0, %s193
        %p195 = pneg %p43
        %p196 = pneg %p40
        %p197 = pneg %p64
        %p198 = pneg %p61
        %p199 = pneg %p85
        %p200 = pneg %p82
        %p201 = pneg %p111
        %p202 = pneg %p108
        %s203 = sand.u32 %s98, 1
        %s204 = scalar_lea.sflag [#allocation3], %s203
        %s205 = sand.u32 %s98, 1
        %s206 = smul.addr %s205, 16
        %s207 = scalar_lea.vmem [#allocation2], %s206
        %p208 = pneg %p137
        %p209 = pneg %p134
        %s210 = sand.u32 %s124, 1
        %s211 = scalar_lea.sflag [#allocation5], %s210
        %s212 = sand.u32 %s124, 1
        %s213 = smul.addr %s212, 16
        %s214 = scalar_lea.vmem [#allocation4], %s213
        %s215 = smul.u32 2, %s22
        %s216 = ssub.s32 3, %s215
        %p217 = scmp.lt.s32.totalorder %s216, 2
        %s218 = scalar_select %p217, %s216, 2
        %s219 = smul.u32 128, %s218
        %p220 = scmp.lt.s32.totalorder %s215, 2
        %s221 = scalar_select %p220, %s215, 2
        %s222 = smul.addr %s221, 8
        %s223 = scalar_lea.vmem %s0, %s222
        %s224 = smul.u32 2, %s22
        %s225 = ssub.s32 3, %s224
        %p226 = scmp.lt.s32.totalorder %s225, 2
        %s227 = scalar_select %p226, %s225, 2
        %s228 = smul.u32 128, %s227
        %s229 = smul.u32 2, %s22
        %s230 = ssub.s32 3, %s229
        %p231 = scmp.lt.s32.totalorder %s230, 2
        %s232 = scalar_select %p231, %s230, 2
        %s233 = smul.u32 128, %s232
        %s234 = smul.u32 2, %s22
        %s235 = ssub.s32 3, %s234
        %p236 = scmp.lt.s32.totalorder %s235, 2
        %s237 = scalar_select %p236, %s235, 2
        %s238 = smul.u32 128, %s237
        %v239 = vld [vmem:[%s223] sm:$0xff]
        %v240 = vld [vmem:[%s223 + $0x8] sm:$0xff]
        %v241 = vld [vmem:[%s1] sm:$0xff]
        %v242 = vld [vmem:[%s2] sm:$0xff]
        %v243 = vand.u32 2147483647, %v239
        %vm244 = vcmp.le.f32.partialorder %v243, 0.7853982
        %vm245 = vcmp.lt.s32.totalorder %v239, 0
        %v246 = vand.u32 %v239, 2139095040
        %v247 = vshrl.u32 %v246, 23
        %v248 = vsub.s32 %v247, 127
        %v249 = vand.u32 2147483647, %v239
        %v250 = vand.u32 %v249, 8388607
        %v251 = vor.u32 %v250, 8388608
        %v252 = vsub.s32 0, %v251
        %v253 = vadd.s32 %v248, 1
        %vm254 = vcmp.gt.s32.totalorder %v253, 0
        %v255 = vsel %vm254, %v253, 0
        %v256 = vshrl.u32 %v255, 5
        %v257 = vand.u32 %v255, 31
        %v258 = vsub.s32 32, %v257
        %v259 = vshrl.u32 683565275, %v258
        %v260 = vshll.u32 683565275, %v257
        %v261 = vshrl.u32 2475754826, %v258
        %v262 = vor.u32 %v260, %v261
        %v263 = vshll.u32 2475754826, %v257
        %v264 = vshrl.u32 2131351028, %v258
        %v265 = vor.u32 %v263, %v264
        %v266 = vshll.u32 2131351028, %v257
        %v267 = vshrl.u32 2102212464, %v258
        %v268 = vor.u32 %v266, %v267
        %v269 = vshll.u32 2102212464, %v257
        %v270 = vshrl.u32 920167782, %v258
        %v271 = vor.u32 %v269, %v270
        %v272 = vshll.u32 920167782, %v257
        %v273 = vshrl.u32 1326507024, %v258
        %v274 = vor.u32 %v272, %v273
        %vm275 = vcmp.lt.s32.totalorder %v256, 1
        %vm276 = vcmp.lt.s32.totalorder %v256, 2
        %vm277 = vcmp.lt.s32.totalorder %v256, 3
        %vm278 = vcmp.lt.s32.totalorder %v256, 4
        %v279 = vsel %vm275, %v259, %v262
        %v280 = vsel %vm278, %v268, 2102212464
        %v281 = vsel %vm277, %v265, %v280
        %v282 = vsel %vm276, %v279, %v281
        %v283 = vsel %vm275, %v262, %v265
        %v284 = vsel %vm278, %v271, 920167782
        %v285 = vsel %vm277, %v268, %v284
        %v286 = vsel %vm276, %v283, %v285
        %v287 = vsel %vm275, %v265, %v268
        %v288 = vsel %vm278, %v274, 1326507024
        %v289 = vsel %vm277, %v271, %v288
        %v290 = vsel %vm276, %v287, %v289
        %v291 = vshll.u32 %v251, 8
        %v292 = vmul.u32.u64.compose %v291, %v290
        %v293 = vextract.low.u32 %v292
        %v294 = vextract.high.u32 %v292
        %v295 = vmul.u32.u64.compose %v291, %v286
        %v296 = vextract.low.u32 %v295
        %v297 = vextract.high.u32 %v295
        %v298 = vmul.u32 %v291, %v282
        %v299 = vadd.s32 %v294, %v296
        %vm300 = vc.u32 %v294, %v296
        %v301 = vadd.s32 %v297, 1
        %v302 = vsel %vm300, %v301, %v297
        %v303 = vadd.s32 %v298, %v302
        %v304 = vadd.s32 %v303, 536870912
        %v305 = vshrl.u32 %v304, 30
        %v306 = vshll.u32 %v305, 30
        %v307 = vsub.s32 %v303, %v306
        %vm308 = vcmp.lt.s32.totalorder %v307, 0
        %v309 = vsub.s32 0, %v307
        %v310 = vsel %vm308, %v309, %v307
        %v311 = vclz %v310
        %v312 = vsub.s32 %v311, 2
        %vm313 = vcmp.gt.s32.totalorder 0, %v312
        %v314 = vsel %vm313, 0, %v312
        %v315 = vsub.s32 32, %v314
        %v316 = vshll.u32 %v307, %v314
        %v317 = vshrl.u32 %v299, %v315
        %v318 = vor.u32 %v316, %v317
        %v319 = vsub.s32 4294967266, %v314
        %v320 = vadd.s32 %v319, 127
        %v321 = vshll.u32 %v320, 23
        %v322 = vor.u32 4788187, %v321
        %v323 = vand.u32 2147483647, %v322
        %v325 = vcvt.s32.f32 %v318
        %v326 = vmul.f32 %v325, %v323
        %v327 = vxor.u32 %v326, 2147483648
        %v328 = vsel %vm245, %v327, %v326
        %v329 = vsub.s32 4, %v305
        %v330 = vsel %vm245, %v329, %v305
        %v331 = vsel %vm244, %v239, %v328
        %v332 = vsel %vm244, 0, %v330
        %v333 = vcosq.f32.pop %v331
        %v334 = vsinq.f32.pop %v331
        %vm335 = vweird.f32 %v239
        %v336 = vand.u32 %v332, 3
        %vm337 = vcmp.lt.s32.totalorder %v336, 2
        %vm338 = vcmp.eq.s32.totalorder %v336, 0
        %v339 = vxor.u32 %v334, 2147483648
        %v340 = vsel %vm338, %v333, %v339
        %vm341 = vcmp.eq.s32.totalorder %v336, 2
        %v342 = vxor.u32 %v333, 2147483648
        %v343 = vsel %vm341, %v342, %v334
        %v344 = vsel %vm337, %v340, %v343
        %v345 = vsel %vm335, nan, %v344
        %v346 = vand.u32 2147483647, %v240
        %vm347 = vcmp.le.f32.partialorder %v346, 0.7853982
        %vm348 = vcmp.lt.s32.totalorder %v240, 0
        %v349 = vand.u32 %v240, 2139095040
        %v350 = vshrl.u32 %v349, 23
        %v351 = vsub.s32 %v350, 127
        %v352 = vand.u32 2147483647, %v240
        %v353 = vand.u32 %v352, 8388607
        %v354 = vor.u32 %v353, 8388608
        %v355 = vsub.s32 0, %v354
        %v356 = vadd.s32 %v351, 1
        %vm357 = vcmp.gt.s32.totalorder %v356, 0
        %v358 = vsel %vm357, %v356, 0
        %v359 = vshrl.u32 %v358, 5
        %v360 = vand.u32 %v358, 31
        %v361 = vsub.s32 32, %v360
        %v362 = vshrl.u32 683565275, %v361
        %v363 = vshll.u32 683565275, %v360
        %v364 = vshrl.u32 2475754826, %v361
        %v365 = vor.u32 %v363, %v364
        %v366 = vshll.u32 2475754826, %v360
        %v367 = vshrl.u32 2131351028, %v361
        %v368 = vor.u32 %v366, %v367
        %v369 = vshll.u32 2131351028, %v360
        %v370 = vshrl.u32 2102212464, %v361
        %v371 = vor.u32 %v369, %v370
        %v372 = vshll.u32 2102212464, %v360
        %v373 = vshrl.u32 920167782, %v361
        %v374 = vor.u32 %v372, %v373
        %v375 = vshll.u32 920167782, %v360
        %v376 = vshrl.u32 1326507024, %v361
        %v377 = vor.u32 %v375, %v376
        %vm378 = vcmp.lt.s32.totalorder %v359, 1
        %vm379 = vcmp.lt.s32.totalorder %v359, 2
        %vm380 = vcmp.lt.s32.totalorder %v359, 3
        %vm381 = vcmp.lt.s32.totalorder %v359, 4
        %v382 = vsel %vm378, %v362, %v365
        %v383 = vsel %vm381, %v371, 2102212464
        %v384 = vsel %vm380, %v368, %v383
        %v385 = vsel %vm379, %v382, %v384
        %v386 = vsel %vm378, %v365, %v368
        %v387 = vsel %vm381, %v374, 920167782
        %v388 = vsel %vm380, %v371, %v387
        %v389 = vsel %vm379, %v386, %v388
        %v390 = vsel %vm378, %v368, %v371
        %v391 = vsel %vm381, %v377, 1326507024
        %v392 = vsel %vm380, %v374, %v391
        %v393 = vsel %vm379, %v390, %v392
        %v394 = vshll.u32 %v354, 8
        %v395 = vmul.u32.u64.compose %v394, %v393
        %v396 = vextract.low.u32 %v395
        %v397 = vextract.high.u32 %v395
        %v398 = vmul.u32.u64.compose %v394, %v389
        %v399 = vextract.low.u32 %v398
        %v400 = vextract.high.u32 %v398
        %v401 = vmul.u32 %v394, %v385
        %v402 = vadd.s32 %v397, %v399
        %vm403 = vc.u32 %v397, %v399
        %v404 = vadd.s32 %v400, 1
        %v405 = vsel %vm403, %v404, %v400
        %v406 = vadd.s32 %v401, %v405
        %v407 = vadd.s32 %v406, 536870912
        %v408 = vshrl.u32 %v407, 30
        %v409 = vshll.u32 %v408, 30
        %v410 = vsub.s32 %v406, %v409
        %vm411 = vcmp.lt.s32.totalorder %v410, 0
        %v412 = vsub.s32 0, %v410
        %v413 = vsel %vm411, %v412, %v410
        %v414 = vclz %v413
        %v415 = vsub.s32 %v414, 2
        %vm416 = vcmp.gt.s32.totalorder 0, %v415
        %v417 = vsel %vm416, 0, %v415
        %v418 = vsub.s32 32, %v417
        %v419 = vshll.u32 %v410, %v417
        %v420 = vshrl.u32 %v402, %v418
        %v421 = vor.u32 %v419, %v420
        %v422 = vsub.s32 4294967266, %v417
        %v423 = vadd.s32 %v422, 127
        %v424 = vshll.u32 %v423, 23
        %v425 = vor.u32 4788187, %v424
        %v426 = vand.u32 2147483647, %v425
        %v428 = vcvt.s32.f32 %v421
        %v429 = vmul.f32 %v428, %v426
        %v430 = vxor.u32 %v429, 2147483648
        %v431 = vsel %vm348, %v430, %v429
        %v432 = vsub.s32 4, %v408
        %v433 = vsel %vm348, %v432, %v408
        %v434 = vsel %vm347, %v240, %v431
        %v435 = vsel %vm347, 0, %v433
        %v436 = vcosq.f32.pop %v434
        %v437 = vsinq.f32.pop %v434
        %vm438 = vweird.f32 %v240
        %v439 = vand.u32 %v435, 3
        %vm440 = vcmp.lt.s32.totalorder %v439, 2
        %vm441 = vcmp.eq.s32.totalorder %v439, 0
        %v442 = vxor.u32 %v437, 2147483648
        %v443 = vsel %vm441, %v436, %v442
        %vm444 = vcmp.eq.s32.totalorder %v439, 2
        %v445 = vxor.u32 %v436, 2147483648
        %v446 = vsel %vm444, %v445, %v437
        %v447 = vsel %vm440, %v443, %v446
        %v448 = vsel %vm438, nan, %v447
        %450 = vset.pattern.permute.xlu0 2
        %451 = vperm.xlu0 %450, %v345
        %v452 = vpop.permute.xlu0 %451
        %455 = vset.pattern.permute.xlu0 2
        %456 = vperm.xlu0 %455, %v448
        %v457 = vpop.permute.xlu0 %456
        %v459 = vlaneseq
        %v460 = vshrl.u32 %v459, 7
        %v461 = vsub.s32 0, %v460
        %v462 = vrot.slane %v242, %v461
        %v463 = vmul.f32 %v452, %v462
        %v464 = vmul.f32 %v457, %v462
        %vm465 = vcmask 64512
        %v467 = vsel %vm465, %v239, 0
        %v470 = vsel %vm465, %v240, 0
        %472 = vmatprep.subr.mxu0 0.0
        %473 = vmatpush1.msra.mxu0 0.0
        %474 = vmatprep.subr.mxu0 0.0
        %475 = vmatpush1.msra.mxu0 0.0
        %476 = vmatprep.subr.mxu0 0.0
        %477 = vmatpush1.msra.mxu0 0.0
        %478 = vmatprep.subr.mxu0 0.0
        %479 = vmatpush1.msra.mxu0 0.0
        %480 = vmatprep.subr.mxu0 0.0
        %481 = vmatpush1.msra.mxu0 0.0
        %482 = vmatprep.subr.mxu0 0.0
        %483 = vmatpush1.msra.mxu0 0.0
        %484 = vmatprep.subr.mxu0 0.0
        %485 = vmatpush1.msra.mxu0 0.0
        %486 = vmatprep.subr.mxu0 0.0
        %487 = vmatpush1.msra.mxu0 0.0
        %488 = vmatprep.subr.mxu0 0.0
        %489 = vmatpush1.msra.mxu0 0.0
        %490 = vmatprep.subr.mxu0 0.0
        %491 = vmatpush1.msra.mxu0 0.0
        %492 = vmatprep.subr.mxu0 0.0
        %493 = vmatpush1.msra.mxu0 0.0
        %494 = vmatprep.subr.mxu0 0.0
        %495 = vmatpush1.msra.mxu0 0.0
        %496 = vmatprep.subr.mxu0 0.0
        %497 = vmatpush1.msra.mxu0 0.0
        %498 = vmatprep.subr.mxu0 0.0
        %499 = vmatpush1.msra.mxu0 0.0
        %500 = vmatprep.subr.mxu0 0.0
        %501 = vmatpush1.msra.mxu0 0.0
        %502 = vmatprep.subr.mxu0 0.0
        %503 = vmatpush1.msra.mxu0 %v241
        %504 = vmatprep.subr.mxu0 0.0
        %505 = vmatpush2.msra.mxu0 0.0
        %506 = vmatprep.subr.mxu0 0.0
        %507 = vmatpush2.msra.mxu0 0.0
        %508 = vmatprep.subr.mxu0 0.0
        %509 = vmatpush2.msra.mxu0 0.0
        %510 = vmatprep.subr.mxu0 0.0
        %511 = vmatpush2.msra.mxu0 0.0
        %512 = vmatprep.subr.mxu0 0.0
        %513 = vmatpush2.msra.mxu0 0.0
        %514 = vmatprep.subr.mxu0 0.0
        %515 = vmatpush2.msra.mxu0 0.0
        %516 = vmatprep.subr.mxu0 0.0
        %517 = vmatpush2.msra.mxu0 0.0
        %518 = vmatprep.subr.mxu0 0.0
        %519 = vmatpush2.msra.mxu0 0.0
        %520 = vmatprep.subr.mxu0 0.0
        %521 = vmatpush2.msra.mxu0 0.0
        %522 = vmatprep.subr.mxu0 0.0
        %523 = vmatpush2.msra.mxu0 0.0
        %524 = vmatprep.subr.mxu0 0.0
        %525 = vmatpush2.msra.mxu0 0.0
        %526 = vmatprep.subr.mxu0 0.0
        %527 = vmatpush2.msra.mxu0 0.0
        %528 = vmatprep.subr.mxu0 0.0
        %529 = vmatpush2.msra.mxu0 0.0
        %530 = vmatprep.subr.mxu0 0.0
        %531 = vmatpush2.msra.mxu0 0.0
        %532 = vmatprep.subr.mxu0 0.0
        %533 = vmatpush2.msra.mxu0 0.0
        %534 = vmatprep.subr.mxu0 0.0
        %535 = vmatpush2.msra.mxu0 0.0
        %536 = vmatprep.mubr.f32.mxu0 0.0
        %537 = vmatmul.mubr.f32.gmra.mxu0 %v467
        %v538 = vpop.f32.mrf.mxu0
        %v539 = vadd.f32 %v463, %v538
        %v540 = vpop.f32.mrf.mxu0
        %541 = vmatprep.mubr.f32.mxu0 0.0
        %542 = vmatmul.mubr.f32.gmra.mxu0 %v470
        %v543 = vpop.f32.mrf.mxu0
        %v544 = vadd.f32 %v464, %v543
        %v545 = vpop.f32.mrf.mxu0
        %546 = vdwg.mxu0
        %v547 = vand.u32 2147483647, %v239
        %vm548 = vcmp.le.f32.partialorder %v547, 0.7853982
        %vm549 = vcmp.lt.s32.totalorder %v239, 0
        %v550 = vand.u32 %v239, 2139095040
        %v551 = vshrl.u32 %v550, 23
        %v552 = vsub.s32 %v551, 127
        %v553 = vand.u32 2147483647, %v239
        %v554 = vand.u32 %v553, 8388607
        %v555 = vor.u32 %v554, 8388608
        %v556 = vsub.s32 0, %v555
        %v557 = vadd.s32 %v552, 1
        %vm558 = vcmp.gt.s32.totalorder %v557, 0
        %v559 = vsel %vm558, %v557, 0
        %v560 = vshrl.u32 %v559, 5
        %v561 = vand.u32 %v559, 31
        %v562 = vsub.s32 32, %v561
        %v563 = vshrl.u32 683565275, %v562
        %v564 = vshll.u32 683565275, %v561
        %v565 = vshrl.u32 2475754826, %v562
        %v566 = vor.u32 %v564, %v565
        %v567 = vshll.u32 2475754826, %v561
        %v568 = vshrl.u32 2131351028, %v562
        %v569 = vor.u32 %v567, %v568
        %v570 = vshll.u32 2131351028, %v561
        %v571 = vshrl.u32 2102212464, %v562
        %v572 = vor.u32 %v570, %v571
        %v573 = vshll.u32 2102212464, %v561
        %v574 = vshrl.u32 920167782, %v562
        %v575 = vor.u32 %v573, %v574
        %v576 = vshll.u32 920167782, %v561
        %v577 = vshrl.u32 1326507024, %v562
        %v578 = vor.u32 %v576, %v577
        %vm579 = vcmp.lt.s32.totalorder %v560, 1
        %vm580 = vcmp.lt.s32.totalorder %v560, 2
        %vm581 = vcmp.lt.s32.totalorder %v560, 3
        %vm582 = vcmp.lt.s32.totalorder %v560, 4
        %v583 = vsel %vm579, %v563, %v566
        %v584 = vsel %vm582, %v572, 2102212464
        %v585 = vsel %vm581, %v569, %v584
        %v586 = vsel %vm580, %v583, %v585
        %v587 = vsel %vm579, %v566, %v569
        %v588 = vsel %vm582, %v575, 920167782
        %v589 = vsel %vm581, %v572, %v588
        %v590 = vsel %vm580, %v587, %v589
        %v591 = vsel %vm579, %v569, %v572
        %v592 = vsel %vm582, %v578, 1326507024
        %v593 = vsel %vm581, %v575, %v592
        %v594 = vsel %vm580, %v591, %v593
        %v595 = vshll.u32 %v555, 8
        %v596 = vmul.u32.u64.compose %v595, %v594
        %v597 = vextract.low.u32 %v596
        %v598 = vextract.high.u32 %v596
        %v599 = vmul.u32.u64.compose %v595, %v590
        %v600 = vextract.low.u32 %v599
        %v601 = vextract.high.u32 %v599
        %v602 = vmul.u32 %v595, %v586
        %v603 = vadd.s32 %v598, %v600
        %vm604 = vc.u32 %v598, %v600
        %v605 = vadd.s32 %v601, 1
        %v606 = vsel %vm604, %v605, %v601
        %v607 = vadd.s32 %v602, %v606
        %v608 = vadd.s32 %v607, 536870912
        %v609 = vshrl.u32 %v608, 30
        %v610 = vshll.u32 %v609, 30
        %v611 = vsub.s32 %v607, %v610
        %vm612 = vcmp.lt.s32.totalorder %v611, 0
        %v613 = vsub.s32 0, %v611
        %v614 = vsel %vm612, %v613, %v611
        %v615 = vclz %v614
        %v616 = vsub.s32 %v615, 2
        %vm617 = vcmp.gt.s32.totalorder 0, %v616
        %v618 = vsel %vm617, 0, %v616
        %v619 = vsub.s32 32, %v618
        %v620 = vshll.u32 %v611, %v618
        %v621 = vshrl.u32 %v603, %v619
        %v622 = vor.u32 %v620, %v621
        %v623 = vsub.s32 4294967266, %v618
        %v624 = vadd.s32 %v623, 127
        %v625 = vshll.u32 %v624, 23
        %v626 = vor.u32 4788187, %v625
        %v627 = vand.u32 2147483647, %v626
        %v629 = vcvt.s32.f32 %v622
        %v630 = vmul.f32 %v629, %v627
        %v631 = vxor.u32 %v630, 2147483648
        %v632 = vsel %vm549, %v631, %v630
        %v633 = vsub.s32 4, %v609
        %v634 = vsel %vm549, %v633, %v609
        %v635 = vsel %vm548, %v239, %v632
        %v636 = vsel %vm548, 0, %v634
        %v637 = vcosq.f32.pop %v635
        %v638 = vsinq.f32.pop %v635
        %vm639 = vweird.f32 %v239
        %v640 = vadd.s32 %v636, 3
        %v641 = vand.u32 %v640, 3
        %vm642 = vcmp.lt.s32.totalorder %v641, 2
        %vm643 = vcmp.eq.s32.totalorder %v641, 0
        %v644 = vxor.u32 %v638, 2147483648
        %v645 = vsel %vm643, %v637, %v644
        %vm646 = vcmp.eq.s32.totalorder %v641, 2
        %v647 = vxor.u32 %v637, 2147483648
        %v648 = vsel %vm646, %v647, %v638
        %v649 = vsel %vm642, %v645, %v648
        %v650 = vsel %vm639, nan, %v649
        %v651 = vand.u32 2147483647, %v240
        %vm652 = vcmp.le.f32.partialorder %v651, 0.7853982
        %vm653 = vcmp.lt.s32.totalorder %v240, 0
        %v654 = vand.u32 %v240, 2139095040
        %v655 = vshrl.u32 %v654, 23
        %v656 = vsub.s32 %v655, 127
        %v657 = vand.u32 2147483647, %v240
        %v658 = vand.u32 %v657, 8388607
        %v659 = vor.u32 %v658, 8388608
        %v660 = vsub.s32 0, %v659
        %v661 = vadd.s32 %v656, 1
        %vm662 = vcmp.gt.s32.totalorder %v661, 0
        %v663 = vsel %vm662, %v661, 0
        %v664 = vshrl.u32 %v663, 5
        %v665 = vand.u32 %v663, 31
        %v666 = vsub.s32 32, %v665
        %v667 = vshrl.u32 683565275, %v666
        %v668 = vshll.u32 683565275, %v665
        %v669 = vshrl.u32 2475754826, %v666
        %v670 = vor.u32 %v668, %v669
        %v671 = vshll.u32 2475754826, %v665
        %v672 = vshrl.u32 2131351028, %v666
        %v673 = vor.u32 %v671, %v672
        %v674 = vshll.u32 2131351028, %v665
        %v675 = vshrl.u32 2102212464, %v666
        %v676 = vor.u32 %v674, %v675
        %v677 = vshll.u32 2102212464, %v665
        %v678 = vshrl.u32 920167782, %v666
        %v679 = vor.u32 %v677, %v678
        %v680 = vshll.u32 920167782, %v665
        %v681 = vshrl.u32 1326507024, %v666
        %v682 = vor.u32 %v680, %v681
        %vm683 = vcmp.lt.s32.totalorder %v664, 1
        %vm684 = vcmp.lt.s32.totalorder %v664, 2
        %vm685 = vcmp.lt.s32.totalorder %v664, 3
        %vm686 = vcmp.lt.s32.totalorder %v664, 4
        %v687 = vsel %vm683, %v667, %v670
        %v688 = vsel %vm686, %v676, 2102212464
        %v689 = vsel %vm685, %v673, %v688
        %v690 = vsel %vm684, %v687, %v689
        %v691 = vsel %vm683, %v670, %v673
        %v692 = vsel %vm686, %v679, 920167782
        %v693 = vsel %vm685, %v676, %v692
        %v694 = vsel %vm684, %v691, %v693
        %v695 = vsel %vm683, %v673, %v676
        %v696 = vsel %vm686, %v682, 1326507024
        %v697 = vsel %vm685, %v679, %v696
        %v698 = vsel %vm684, %v695, %v697
        %v699 = vshll.u32 %v659, 8
        %v700 = vmul.u32.u64.compose %v699, %v698
        %v701 = vextract.low.u32 %v700
        %v702 = vextract.high.u32 %v700
        %v703 = vmul.u32.u64.compose %v699, %v694
        %v704 = vextract.low.u32 %v703
        %v705 = vextract.high.u32 %v703
        %v706 = vmul.u32 %v699, %v690
        %v707 = vadd.s32 %v702, %v704
        %vm708 = vc.u32 %v702, %v704
        %v709 = vadd.s32 %v705, 1
        %v710 = vsel %vm708, %v709, %v705
        %v711 = vadd.s32 %v706, %v710
        %v712 = vadd.s32 %v711, 536870912
        %v713 = vshrl.u32 %v712, 30
        %v714 = vshll.u32 %v713, 30
        %v715 = vsub.s32 %v711, %v714
        %vm716 = vcmp.lt.s32.totalorder %v715, 0
        %v717 = vsub.s32 0, %v715
        %v718 = vsel %vm716, %v717, %v715
        %v719 = vclz %v718
        %v720 = vsub.s32 %v719, 2
        %vm721 = vcmp.gt.s32.totalorder 0, %v720
        %v722 = vsel %vm721, 0, %v720
        %v723 = vsub.s32 32, %v722
        %v724 = vshll.u32 %v715, %v722
        %v725 = vshrl.u32 %v707, %v723
        %v726 = vor.u32 %v724, %v725
        %v727 = vsub.s32 4294967266, %v722
        %v728 = vadd.s32 %v727, 127
        %v729 = vshll.u32 %v728, 23
        %v730 = vor.u32 4788187, %v729
        %v731 = vand.u32 2147483647, %v730
        %v733 = vcvt.s32.f32 %v726
        %v734 = vmul.f32 %v733, %v731
        %v735 = vxor.u32 %v734, 2147483648
        %v736 = vsel %vm653, %v735, %v734
        %v737 = vsub.s32 4, %v713
        %v738 = vsel %vm653, %v737, %v713
        %v739 = vsel %vm652, %v240, %v736
        %v740 = vsel %vm652, 0, %v738
        %v741 = vcosq.f32.pop %v739
        %v742 = vsinq.f32.pop %v739
        %vm743 = vweird.f32 %v240
        %v744 = vadd.s32 %v740, 3
        %v745 = vand.u32 %v744, 3
        %vm746 = vcmp.lt.s32.totalorder %v745, 2
        %vm747 = vcmp.eq.s32.totalorder %v745, 0
        %v748 = vxor.u32 %v742, 2147483648
        %v749 = vsel %vm747, %v741, %v748
        %vm750 = vcmp.eq.s32.totalorder %v745, 2
        %v751 = vxor.u32 %v741, 2147483648
        %v752 = vsel %vm750, %v751, %v742
        %v753 = vsel %vm746, %v749, %v752
        %v754 = vsel %vm743, nan, %v753
        %756 = vset.pattern.permute.xlu0 2
        %757 = vperm.xlu0 %756, %v650
        %v758 = vpop.permute.xlu0 %757
        %761 = vset.pattern.permute.xlu0 2
        %762 = vperm.xlu0 %761, %v754
        %v763 = vpop.permute.xlu0 %762
        %v765 = vlaneseq
        %v766 = vshrl.u32 %v765, 7
        %v767 = vsub.s32 1, %v766
        %v768 = vrot.slane %v242, %v767
        %v769 = vmul.f32 %v758, %v768
        %v770 = vmul.f32 %v763, %v768
        %v771 = vadd.f32 %v539, %v769
        %v772 = vadd.f32 %v544, %v770
        %v773 = vlaneseq
        %v774 = vshrl.u32 %v773, 7
        %v775 = vsub.s32 2, %v774
        %v776 = vrot.slane %v242, %v775
        %v777 = vadd.f32 %v771, %v776
        %v778 = vadd.f32 %v772, %v776
        %v779 = vmax.f32 %v777, 0.0
        %v780 = vmax.f32 %v778, 0.0
        %vm781 = vcmask 261120
        %782 = vst.msk [vmem:[%s207] sm:$0xff] %vm781, %v779
        %783 = vst.msk [vmem:[%s207 + $0x8] sm:$0xff] %vm781, %v780
        %786 = vrot.lane.b32.xlu0 %v779, 96
        %v787 = vpop.permute.xlu0 %786
        %788 = vrot.lane.b32.xlu0 %v780, 96
        %v789 = vpop.permute.xlu0 %788
        %792 = vst.msk [vmem:[%s214] sm:$0xff] %vm781, %v787
        %793 = vst.msk [vmem:[%s214 + $0x8] sm:$0xff] %vm781, %v789
        %s794 = sand.u32 %s98, 1
        %s795 = scalar_lea.sflag [#allocation3], %s794
        %s796 = sand.u32 %s98, 1
        %s797 = smul.addr %s796, 16
        %s798 = scalar_lea.vmem [#allocation2], %s797
        %s799 = sand.u32 %s124, 1
        %s800 = scalar_lea.sflag [#allocation5], %s799
        %s801 = sand.u32 %s124, 1
        %s802 = smul.addr %s801, 16
        %s803 = scalar_lea.vmem [#allocation4], %s802
        // Predicated region
        $region33: #{tpu_custom_call.1} parent=31 // pred_check
          %p804 = pneg %p108
        $region34: #{tpu_custom_call.1} parent=31 // pred_check_branch
          %806 = sbr.rel (%p804) target = $region36
        $region35: #{tpu_custom_call.1} parent=31 // pred_region
          %s807 = smul.u32 2, %s22
          %s808 = ssub.s32 3, %s807
          %p809 = scmp.lt.s32.totalorder %s808, 2
          %s810 = scalar_select %p809, %s808, 2
          %s811 = smul.u32 128, %s810
          %s813 = ssub.s32 256, %s811
          %814 = vsyncadd %s795, %s813
          %p815 = scmp.ne.s32.totalorder 0, %s811
          %s816 = smul.addr %s807, 128
          %s817 = scalar_lea.hbm %s3, %s816
          %s818 = smul.u32 8, %s810
          %s819 = sshll.u32 %s798, 4
          %s820 = int_to_ptr.vmem [resolvable:$true] %s819
          %s821 = sshll.u32 %s818, 4
          %825 = dma.vmem_to_hbm [thread:$0]  (%p815), %s820, %s821, %s817, %s795, 128, 128, 8
        $region36: #{tpu_custom_call.1} parent=31 // pred_fallthru
          _
        // Predicated region
        $region37: #{tpu_custom_call.1} parent=31 // pred_check
          %p826 = pneg %p134
        $region38: #{tpu_custom_call.1} parent=31 // pred_check_branch
          %828 = sbr.rel (%p826) target = $region40
        $region39: #{tpu_custom_call.1} parent=31 // pred_region
          %s829 = smul.u32 2, %s22
          %s830 = ssub.s32 3, %s829
          %p831 = scmp.lt.s32.totalorder %s830, 2
          %s832 = scalar_select %p831, %s830, 2
          %s833 = smul.u32 128, %s832
          %s835 = ssub.s32 256, %s833
          %836 = vsyncadd %s800, %s835
          %p837 = scmp.ne.s32.totalorder 0, %s833
          %s838 = smul.addr %s829, 128
          %s839 = scalar_lea.hbm %s4, %s838
          %s840 = smul.u32 8, %s832
          %s841 = sshll.u32 %s803, 4
          %s842 = int_to_ptr.vmem [resolvable:$true] %s841
          %s843 = sshll.u32 %s840, 4
          %847 = dma.vmem_to_hbm [thread:$0]  (%p837), %s842, %s843, %s839, %s800, 128, 128, 8
        $region40: #{tpu_custom_call.1} parent=31 // pred_fallthru
          _
      $region32: #{tpu_custom_call.1} parent=5 // pred_fallthru
        _
      %p848 = scmp.le.s32.totalorder 2, %s17
      // Predicated region
      $region41: #{tpu_custom_call.1} parent=5 // pred_check
        %p849 = pneg %p848
      $region42: #{tpu_custom_call.1} parent=5 // pred_check_branch
        %851 = sbr.rel (%p849) target = $region44
      $region43: #{tpu_custom_call.1} parent=5 // pred_region
        %s852 = ssub.s32 %s17, 2
        // Predicated region
        $region45: #{tpu_custom_call.1} parent=43 // pred_check
          %p853 = pneg %p114
        $region46: #{tpu_custom_call.1} parent=43 // pred_check_branch
          %855 = sbr.rel (%p853) target = $region48
        $region47: #{tpu_custom_call.1} parent=43 // pred_region
          %s856 = sand.u32 %s99, 1
          %s857 = scalar_lea.sflag [#allocation3], %s856
          %s858 = sand.u32 %s99, 1
          %s859 = smul.addr %s858, 16
          %s860 = scalar_lea.vmem [#allocation2], %s859
          %861 = dma.done %s857, 256
        $region48: #{tpu_custom_call.1} parent=43 // pred_fallthru
          _
        // Predicated region
        $region49: #{tpu_custom_call.1} parent=43 // pred_check
          %p862 = pneg %p140
        $region50: #{tpu_custom_call.1} parent=43 // pred_check_branch
          %864 = sbr.rel (%p862) target = $region52
        $region51: #{tpu_custom_call.1} parent=43 // pred_region
          %s865 = sand.u32 %s125, 1
          %s866 = scalar_lea.sflag [#allocation5], %s865
          %s867 = sand.u32 %s125, 1
          %s868 = smul.addr %s867, 16
          %s869 = scalar_lea.vmem [#allocation4], %s868
          %870 = dma.done %s866, 256
        $region52: #{tpu_custom_call.1} parent=43 // pred_fallthru
          _
      $region44: #{tpu_custom_call.1} parent=5 // pred_fallthru
        _
    $region6: #{tpu_custom_call.1} parent=1 // loop_footer
      %s21 = sadd.s32 1, %s17
    $region7: #{tpu_custom_call.1} parent=1 // loop_footer_branch
      %16 = sbr.rel target = $region3
    $region8: #{tpu_custom_call.1} parent=1 // loop_exit
      _
    %871 = vsyncpa [#allocation3], 1
    %s872 = scalar_lea.sflag [#allocation3], 1
    %873 = vsyncpa %s872, 1
    %874 = vsyncpa [#allocation5], 1
    %s875 = scalar_lea.sflag [#allocation5], 1
    %876 = vsyncpa %s875, 1

</llo_original>
